<compile_context>
chip_gen: v7x
topology: tpu7x:2x2x1
jax: 0.10.0
libtpu: 0.0.40
codegen_flags: <defaults>
</compile_context>

<pallas_src>
import jax
import jax.numpy as jnp
from jax.experimental import pallas as pl
from jax.experimental.pallas import tpu as pltpu

NEG_SLOPE = 0.01
IN_FEATURES = 3
H1_FEATURES = 10
H2_FEATURES = 20
OUT_FEATURES = 5
LANE = 128


def _round_up(n, m):
    return ((n + m - 1) // m) * m


def _dense_fma(w_ref, b_ref, x):
    """Exact f32 dense layer in feature-major layout.

    w_ref: (out, in) VMEM ref, b_ref: (out, 1) VMEM ref, x: (in, TILE_B) value.
    Returns (out, TILE_B) = b + sum_k w[:, k] (outer) x[k, :]  -- pure VPU FMAs,
    no MXU (tiny contraction dims) and no reduced-precision passes.
    """
    in_f = w_ref.shape[1]
    acc = b_ref[...] + w_ref[:, 0:1] * x[0:1, :]
    for k in range(1, in_f):
        acc = acc + w_ref[:, k : k + 1] * x[k : k + 1, :]
    return acc


def mlp_kernel(x_ref, w1_ref, b1_ref, w2_ref, b2_ref, w3_ref, b3_ref, out_ref):
    """One batch tile: fc1 -> leaky_relu -> fc2 -> leaky_relu -> fc3 -> softmax(features)."""
    neg = jnp.float32(NEG_SLOPE)

    x = x_ref[...]                                   # (3, TILE_B), lane-dense

    h1 = _dense_fma(w1_ref, b1_ref, x)               # (10, TILE_B)
    h1 = jnp.maximum(h1, neg * h1)                   # leaky_relu (exact, same as where(h>0,h,0.01h))

    h2 = _dense_fma(w2_ref, b2_ref, h1)              # (20, TILE_B)
    h2 = jnp.maximum(h2, neg * h2)

    h3 = _dense_fma(w3_ref, b3_ref, h2)              # (5, TILE_B)

    # Softmax over the feature axis (sublanes). Unrolled pairwise row ops keep
    # the reductions on the VPU (no cross-lane XLU traffic); broadcasts of the
    # (1, TILE_B) max / denom along sublanes are cheap.
    m = h3[0:1, :]
    for j in range(1, OUT_FEATURES):
        m = jnp.maximum(m, h3[j : j + 1, :])
    e = jnp.exp(h3 - m)
    denom = e[0:1, :]
    for j in range(1, OUT_FEATURES):
        denom = denom + e[j : j + 1, :]
    # Exact division (approx reciprocal previously violated the 1e-4 tolerance).
    out_ref[...] = (e / denom).astype(out_ref.dtype)
    # NOTE: the PyTorch forward also print()s intermediates; that is host-side
    # debug I/O, intentionally omitted.
    # TODO(synk): use pl.debug_print if intermediate logging is ever needed.


def ai_network_forward(x, params, *, tile_b=8192):
    """Batch-tiled, feature-major Pallas forward pass of AI_Network.

    x: (batch, 3) float32, params: PyTorch-style (out, in) weights + (out, 1) biases.
    Returns (batch, 5) softmax probabilities.
    """
    w1, b1, w2, b2, w3, b3 = params
    batch = x.shape[0]

    # Batch lives on the lane axis: tile must be a multiple of 128. Clamp to the
    # (rounded-up) batch so tiny batches don't over-pad; default 8192 amortizes
    # the ~0.35us/grid-step overhead while keeping the VMEM footprint tiny
    # (x tile = 3*tile_b*4 B, out tile = 5*tile_b*4 B -> well under v7x limits).
    tile_b = max(LANE, min(_round_up(tile_b, LANE), _round_up(batch, LANE)))
    padded = _round_up(batch, tile_b)

    x_t = x.astype(jnp.float32).T                    # (3, batch) feature-major
    if padded != batch:
        x_t = jnp.pad(x_t, ((0, 0), (0, padded - batch)))
    num_tiles = padded // tile_b

    # x / out tiled along the batch (lane) axis; parameters use constant block
    # indices so they are fetched once and stay VMEM-resident across grid steps.
    x_spec = pl.BlockSpec((IN_FEATURES, tile_b), lambda i: (0, i))
    out_spec = pl.BlockSpec((OUT_FEATURES, tile_b), lambda i: (0, i))
    resident = lambda a: pl.BlockSpec(a.shape, lambda i: (0, 0))

    flops = 2 * batch * (IN_FEATURES * H1_FEATURES
                         + H1_FEATURES * H2_FEATURES
                         + H2_FEATURES * OUT_FEATURES)
    cost = pl.CostEstimate(
        flops=flops,
        transcendentals=batch * OUT_FEATURES,
        bytes_accessed=batch * (IN_FEATURES + OUT_FEATURES) * 4,
    )

    out_t = pl.pallas_call(
        mlp_kernel,
        out_shape=jax.ShapeDtypeStruct((OUT_FEATURES, padded), jnp.float32),
        grid=(num_tiles,),
        in_specs=[x_spec, resident(w1), resident(b1), resident(w2),
                  resident(b2), resident(w3), resident(b3)],
        out_specs=out_spec,
        compiler_params=pltpu.CompilerParams(
            dimension_semantics=("parallel",)),      # shard batch tiles across TCs (v7x)
        cost_estimate=cost,
    )(x_t, w1, b1, w2, b2, w3, b3)

    return out_t[:, :batch].T                        # (batch, 5)


def init_params(key):
    """Deterministic init mimicking nn.Linear's uniform(-1/sqrt(fan_in), +) init.

    Weights are PyTorch-shaped (out, in); biases are (out, 1).
    """
    dims = [(IN_FEATURES, H1_FEATURES), (H1_FEATURES, H2_FEATURES),
            (H2_FEATURES, OUT_FEATURES)]
    params = []
    for fan_in, fan_out in dims:
        key, kw, kb = jax.random.split(key, 3)
        bound = 1.0 / jnp.sqrt(jnp.float32(fan_in))
        w = jax.random.uniform(kw, (fan_out, fan_in), jnp.float32, -bound, bound)
        b = jax.random.uniform(kb, (fan_out, 1), jnp.float32, -bound, bound)
        params.extend([w, b])
    return tuple(params)


def reference_forward(x, params):
    """Pure-JAX reference (exact f32 dots) for correctness checking."""
    w1, b1, w2, b2, w3, b3 = params
    hp = jax.lax.Precision.HIGHEST
    h1 = jnp.dot(x, w1.T, precision=hp) + b1.T
    h1 = jnp.where(h1 > 0, h1, NEG_SLOPE * h1)
    h2 = jnp.dot(h1, w2.T, precision=hp) + b2.T
    h2 = jnp.where(h2 > 0, h2, NEG_SLOPE * h2)
    h3 = jnp.dot(h2, w3.T, precision=hp) + b3.T
    return jax.nn.softmax(h3, axis=1)


if __name__ == "__main__":
    key = jax.random.PRNGKey(0)
    key, kx, kp = jax.random.split(key, 3)
    params = init_params(kp)

    # Small batch (single 128-lane tile after padding).
    batch = 16
    x = jax.random.normal(kx, (batch, IN_FEATURES), jnp.float32)
    out = jax.block_until_ready(ai_network_forward(x, params))
    ref = reference_forward(x, params)
    assert out.shape == (batch, OUT_FEATURES)
    assert jnp.allclose(out, ref, atol=1e-4, rtol=1e-4)
    assert jnp.allclose(jnp.sum(out, axis=1), jnp.ones((batch,)), atol=1e-4)

    # Batch that is not a multiple of 128 and exercises a multi-tile grid
    # (tile_b=128 -> padded to 384 -> 3 grid steps).
    key, kx2 = jax.random.split(key)
    batch2 = 300
    x2 = jax.random.normal(kx2, (batch2, IN_FEATURES), jnp.float32)
    out2 = jax.block_until_ready(ai_network_forward(x2, params, tile_b=128))
    ref2 = reference_forward(x2, params)
    assert out2.shape == (batch2, OUT_FEATURES)
    assert jnp.allclose(out2, ref2, atol=1e-4, rtol=1e-4)
    assert jnp.allclose(jnp.sum(out2, axis=1), jnp.ones((batch2,)), atol=1e-4)

    print("KERNEL_OK")
</pallas_src>

<mosaic_0001>
module attributes {stable_mosaic.version = 11 : i64} {
  func.func @mlp_kernel(%arg0: i32, %arg1: memref<3x128xf32, #tpu.memory_space<vmem>>, %arg2: memref<10x3xf32, #tpu.memory_space<vmem>>, %arg3: memref<10x1xf32, #tpu.memory_space<vmem>>, %arg4: memref<20x10xf32, #tpu.memory_space<vmem>>, %arg5: memref<20x1xf32, #tpu.memory_space<vmem>>, %arg6: memref<5x20xf32, #tpu.memory_space<vmem>>, %arg7: memref<5x1xf32, #tpu.memory_space<vmem>>, %arg8: memref<5x128xf32, #tpu.memory_space<vmem>>) attributes {dimension_semantics = [#tpu.dimension_semantics<parallel>], iteration_bounds = array<i64: 1>, scalar_prefetch = 0 : i64, scratch_operands = 0 : i64, tpu.core_type = #tpu.core_type<tc>, window_params = [{transform_indices = @transform_0, window_bounds = array<i64: 3, 128>}, {pipeline_mode = #tpu.pipeline_mode<synchronous>, transform_indices = @transform_1, window_bounds = array<i64: 10, 3>}, {pipeline_mode = #tpu.pipeline_mode<synchronous>, transform_indices = @transform_2, window_bounds = array<i64: 10, 1>}, {pipeline_mode = #tpu.pipeline_mode<synchronous>, transform_indices = @transform_3, window_bounds = array<i64: 20, 10>}, {pipeline_mode = #tpu.pipeline_mode<synchronous>, transform_indices = @transform_4, window_bounds = array<i64: 20, 1>}, {pipeline_mode = #tpu.pipeline_mode<synchronous>, transform_indices = @transform_5, window_bounds = array<i64: 5, 20>}, {pipeline_mode = #tpu.pipeline_mode<synchronous>, transform_indices = @transform_6, window_bounds = array<i64: 5, 1>}, {transform_indices = @transform_7, window_bounds = array<i64: 5, 128>}]} {
    %c0 = arith.constant 0 : index
    %c0_0 = arith.constant 0 : index
    %0 = vector.load %arg1[%c0, %c0_0] : memref<3x128xf32, #tpu.memory_space<vmem>>, vector<3x128xf32>
    %c0_1 = arith.constant 0 : index
    %c0_2 = arith.constant 0 : index
    %1 = vector.load %arg3[%c0_1, %c0_2] : memref<10x1xf32, #tpu.memory_space<vmem>>, vector<10x1xf32>
    %c0_3 = arith.constant 0 : index
    %c0_4 = arith.constant 0 : index
    %2 = vector.load %arg2[%c0_3, %c0_4] : memref<10x3xf32, #tpu.memory_space<vmem>>, vector<10x1xf32>
    %3 = vector.extract_strided_slice %0 {offsets = [0, 0], sizes = [1, 128], strides = [1, 1]} : vector<3x128xf32> to vector<1x128xf32>
    %4 = vector.broadcast %2 : vector<10x1xf32> to vector<10x128xf32>
    %5 = vector.broadcast %3 : vector<1x128xf32> to vector<10x128xf32>
    %6 = arith.mulf %4, %5 : vector<10x128xf32>
    %7 = vector.broadcast %1 : vector<10x1xf32> to vector<10x128xf32>
    %8 = arith.addf %7, %6 : vector<10x128xf32>
    %c0_5 = arith.constant 0 : index
    %c1 = arith.constant 1 : index
    %9 = vector.load %arg2[%c0_5, %c1] : memref<10x3xf32, #tpu.memory_space<vmem>>, vector<10x1xf32>
    %10 = vector.extract_strided_slice %0 {offsets = [1, 0], sizes = [1, 128], strides = [1, 1]} : vector<3x128xf32> to vector<1x128xf32>
    %11 = vector.broadcast %9 : vector<10x1xf32> to vector<10x128xf32>
    %12 = vector.broadcast %10 : vector<1x128xf32> to vector<10x128xf32>
    %13 = arith.mulf %11, %12 : vector<10x128xf32>
    %14 = arith.addf %8, %13 : vector<10x128xf32>
    %c0_6 = arith.constant 0 : index
    %c2 = arith.constant 2 : index
    %15 = vector.load %arg2[%c0_6, %c2] : memref<10x3xf32, #tpu.memory_space<vmem>>, vector<10x1xf32>
    %16 = vector.extract_strided_slice %0 {offsets = [2, 0], sizes = [1, 128], strides = [1, 1]} : vector<3x128xf32> to vector<1x128xf32>
    %17 = vector.broadcast %15 : vector<10x1xf32> to vector<10x128xf32>
    %18 = vector.broadcast %16 : vector<1x128xf32> to vector<10x128xf32>
    %19 = arith.mulf %17, %18 : vector<10x128xf32>
    %20 = arith.addf %14, %19 : vector<10x128xf32>
    %cst = arith.constant 0.00999999977 : f32
    %21 = vector.broadcast %cst : f32 to vector<10x128xf32>
    %22 = arith.mulf %21, %20 : vector<10x128xf32>
    %23 = arith.maximumf %20, %22 : vector<10x128xf32>
    %c0_7 = arith.constant 0 : index
    %c0_8 = arith.constant 0 : index
    %24 = vector.load %arg5[%c0_7, %c0_8] : memref<20x1xf32, #tpu.memory_space<vmem>>, vector<20x1xf32>
    %c0_9 = arith.constant 0 : index
    %c0_10 = arith.constant 0 : index
    %25 = vector.load %arg4[%c0_9, %c0_10] : memref<20x10xf32, #tpu.memory_space<vmem>>, vector<20x1xf32>
    %26 = vector.extract_strided_slice %23 {offsets = [0, 0], sizes = [1, 128], strides = [1, 1]} : vector<10x128xf32> to vector<1x128xf32>
    %27 = vector.broadcast %25 : vector<20x1xf32> to vector<20x128xf32>
    %28 = vector.broadcast %26 : vector<1x128xf32> to vector<20x128xf32>
    %29 = arith.mulf %27, %28 : vector<20x128xf32>
    %30 = vector.broadcast %24 : vector<20x1xf32> to vector<20x128xf32>
    %31 = arith.addf %30, %29 : vector<20x128xf32>
    %c0_11 = arith.constant 0 : index
    %c1_12 = arith.constant 1 : index
    %32 = vector.load %arg4[%c0_11, %c1_12] : memref<20x10xf32, #tpu.memory_space<vmem>>, vector<20x1xf32>
    %33 = vector.extract_strided_slice %23 {offsets = [1, 0], sizes = [1, 128], strides = [1, 1]} : vector<10x128xf32> to vector<1x128xf32>
    %34 = vector.broadcast %32 : vector<20x1xf32> to vector<20x128xf32>
    %35 = vector.broadcast %33 : vector<1x128xf32> to vector<20x128xf32>
    %36 = arith.mulf %34, %35 : vector<20x128xf32>
    %37 = arith.addf %31, %36 : vector<20x128xf32>
    %c0_13 = arith.constant 0 : index
    %c2_14 = arith.constant 2 : index
    %38 = vector.load %arg4[%c0_13, %c2_14] : memref<20x10xf32, #tpu.memory_space<vmem>>, vector<20x1xf32>
    %39 = vector.extract_strided_slice %23 {offsets = [2, 0], sizes = [1, 128], strides = [1, 1]} : vector<10x128xf32> to vector<1x128xf32>
    %40 = vector.broadcast %38 : vector<20x1xf32> to vector<20x128xf32>
    %41 = vector.broadcast %39 : vector<1x128xf32> to vector<20x128xf32>
    %42 = arith.mulf %40, %41 : vector<20x128xf32>
    %43 = arith.addf %37, %42 : vector<20x128xf32>
    %c0_15 = arith.constant 0 : index
    %c3 = arith.constant 3 : index
    %44 = vector.load %arg4[%c0_15, %c3] : memref<20x10xf32, #tpu.memory_space<vmem>>, vector<20x1xf32>
    %45 = vector.extract_strided_slice %23 {offsets = [3, 0], sizes = [1, 128], strides = [1, 1]} : vector<10x128xf32> to vector<1x128xf32>
    %46 = vector.broadcast %44 : vector<20x1xf32> to vector<20x128xf32>
    %47 = vector.broadcast %45 : vector<1x128xf32> to vector<20x128xf32>
    %48 = arith.mulf %46, %47 : vector<20x128xf32>
    %49 = arith.addf %43, %48 : vector<20x128xf32>
    %c0_16 = arith.constant 0 : index
    %c4 = arith.constant 4 : index
    %50 = vector.load %arg4[%c0_16, %c4] : memref<20x10xf32, #tpu.memory_space<vmem>>, vector<20x1xf32>
    %51 = vector.extract_strided_slice %23 {offsets = [4, 0], sizes = [1, 128], strides = [1, 1]} : vector<10x128xf32> to vector<1x128xf32>
    %52 = vector.broadcast %50 : vector<20x1xf32> to vector<20x128xf32>
    %53 = vector.broadcast %51 : vector<1x128xf32> to vector<20x128xf32>
    %54 = arith.mulf %52, %53 : vector<20x128xf32>
    %55 = arith.addf %49, %54 : vector<20x128xf32>
    %c0_17 = arith.constant 0 : index
    %c5 = arith.constant 5 : index
    %56 = vector.load %arg4[%c0_17, %c5] : memref<20x10xf32, #tpu.memory_space<vmem>>, vector<20x1xf32>
    %57 = vector.extract_strided_slice %23 {offsets = [5, 0], sizes = [1, 128], strides = [1, 1]} : vector<10x128xf32> to vector<1x128xf32>
    %58 = vector.broadcast %56 : vector<20x1xf32> to vector<20x128xf32>
    %59 = vector.broadcast %57 : vector<1x128xf32> to vector<20x128xf32>
    %60 = arith.mulf %58, %59 : vector<20x128xf32>
    %61 = arith.addf %55, %60 : vector<20x128xf32>
    %c0_18 = arith.constant 0 : index
    %c6 = arith.constant 6 : index
    %62 = vector.load %arg4[%c0_18, %c6] : memref<20x10xf32, #tpu.memory_space<vmem>>, vector<20x1xf32>
    %63 = vector.extract_strided_slice %23 {offsets = [6, 0], sizes = [1, 128], strides = [1, 1]} : vector<10x128xf32> to vector<1x128xf32>
    %64 = vector.broadcast %62 : vector<20x1xf32> to vector<20x128xf32>
    %65 = vector.broadcast %63 : vector<1x128xf32> to vector<20x128xf32>
    %66 = arith.mulf %64, %65 : vector<20x128xf32>
    %67 = arith.addf %61, %66 : vector<20x128xf32>
    %c0_19 = arith.constant 0 : index
    %c7 = arith.constant 7 : index
    %68 = vector.load %arg4[%c0_19, %c7] : memref<20x10xf32, #tpu.memory_space<vmem>>, vector<20x1xf32>
    %69 = vector.extract_strided_slice %23 {offsets = [7, 0], sizes = [1, 128], strides = [1, 1]} : vector<10x128xf32> to vector<1x128xf32>
    %70 = vector.broadcast %68 : vector<20x1xf32> to vector<20x128xf32>
    %71 = vector.broadcast %69 : vector<1x128xf32> to vector<20x128xf32>
    %72 = arith.mulf %70, %71 : vector<20x128xf32>
    %73 = arith.addf %67, %72 : vector<20x128xf32>
    %c0_20 = arith.constant 0 : index
    %c8 = arith.constant 8 : index
    %74 = vector.load %arg4[%c0_20, %c8] : memref<20x10xf32, #tpu.memory_space<vmem>>, vector<20x1xf32>
    %75 = vector.extract_strided_slice %23 {offsets = [8, 0], sizes = [1, 128], strides = [1, 1]} : vector<10x128xf32> to vector<1x128xf32>
    %76 = vector.broadcast %74 : vector<20x1xf32> to vector<20x128xf32>
    %77 = vector.broadcast %75 : vector<1x128xf32> to vector<20x128xf32>
    %78 = arith.mulf %76, %77 : vector<20x128xf32>
    %79 = arith.addf %73, %78 : vector<20x128xf32>
    %c0_21 = arith.constant 0 : index
    %c9 = arith.constant 9 : index
    %80 = vector.load %arg4[%c0_21, %c9] : memref<20x10xf32, #tpu.memory_space<vmem>>, vector<20x1xf32>
    %81 = vector.extract_strided_slice %23 {offsets = [9, 0], sizes = [1, 128], strides = [1, 1]} : vector<10x128xf32> to vector<1x128xf32>
    %82 = vector.broadcast %80 : vector<20x1xf32> to vector<20x128xf32>
    %83 = vector.broadcast %81 : vector<1x128xf32> to vector<20x128xf32>
    %84 = arith.mulf %82, %83 : vector<20x128xf32>
    %85 = arith.addf %79, %84 : vector<20x128xf32>
    %cst_22 = arith.constant 0.00999999977 : f32
    %86 = vector.broadcast %cst_22 : f32 to vector<20x128xf32>
    %87 = arith.mulf %86, %85 : vector<20x128xf32>
    %88 = arith.maximumf %85, %87 : vector<20x128xf32>
    %c0_23 = arith.constant 0 : index
    %c0_24 = arith.constant 0 : index
    %89 = vector.load %arg7[%c0_23, %c0_24] : memref<5x1xf32, #tpu.memory_space<vmem>>, vector<5x1xf32>
    %c0_25 = arith.constant 0 : index
    %c0_26 = arith.constant 0 : index
    %90 = vector.load %arg6[%c0_25, %c0_26] : memref<5x20xf32, #tpu.memory_space<vmem>>, vector<5x1xf32>
    %91 = vector.extract_strided_slice %88 {offsets = [0, 0], sizes = [1, 128], strides = [1, 1]} : vector<20x128xf32> to vector<1x128xf32>
    %92 = vector.broadcast %90 : vector<5x1xf32> to vector<5x128xf32>
    %93 = vector.broadcast %91 : vector<1x128xf32> to vector<5x128xf32>
    %94 = arith.mulf %92, %93 : vector<5x128xf32>
    %95 = vector.broadcast %89 : vector<5x1xf32> to vector<5x128xf32>
    %96 = arith.addf %95, %94 : vector<5x128xf32>
    %c0_27 = arith.constant 0 : index
    %c1_28 = arith.constant 1 : index
    %97 = vector.load %arg6[%c0_27, %c1_28] : memref<5x20xf32, #tpu.memory_space<vmem>>, vector<5x1xf32>
    %98 = vector.extract_strided_slice %88 {offsets = [1, 0], sizes = [1, 128], strides = [1, 1]} : vector<20x128xf32> to vector<1x128xf32>
    %99 = vector.broadcast %97 : vector<5x1xf32> to vector<5x128xf32>
    %100 = vector.broadcast %98 : vector<1x128xf32> to vector<5x128xf32>
    %101 = arith.mulf %99, %100 : vector<5x128xf32>
    %102 = arith.addf %96, %101 : vector<5x128xf32>
    %c0_29 = arith.constant 0 : index
    %c2_30 = arith.constant 2 : index
    %103 = vector.load %arg6[%c0_29, %c2_30] : memref<5x20xf32, #tpu.memory_space<vmem>>, vector<5x1xf32>
    %104 = vector.extract_strided_slice %88 {offsets = [2, 0], sizes = [1, 128], strides = [1, 1]} : vector<20x128xf32> to vector<1x128xf32>
    %105 = vector.broadcast %103 : vector<5x1xf32> to vector<5x128xf32>
    %106 = vector.broadcast %104 : vector<1x128xf32> to vector<5x128xf32>
    %107 = arith.mulf %105, %106 : vector<5x128xf32>
    %108 = arith.addf %102, %107 : vector<5x128xf32>
    %c0_31 = arith.constant 0 : index
    %c3_32 = arith.constant 3 : index
    %109 = vector.load %arg6[%c0_31, %c3_32] : memref<5x20xf32, #tpu.memory_space<vmem>>, vector<5x1xf32>
    %110 = vector.extract_strided_slice %88 {offsets = [3, 0], sizes = [1, 128], strides = [1, 1]} : vector<20x128xf32> to vector<1x128xf32>
    %111 = vector.broadcast %109 : vector<5x1xf32> to vector<5x128xf32>
    %112 = vector.broadcast %110 : vector<1x128xf32> to vector<5x128xf32>
    %113 = arith.mulf %111, %112 : vector<5x128xf32>
    %114 = arith.addf %108, %113 : vector<5x128xf32>
    %c0_33 = arith.constant 0 : index
    %c4_34 = arith.constant 4 : index
    %115 = vector.load %arg6[%c0_33, %c4_34] : memref<5x20xf32, #tpu.memory_space<vmem>>, vector<5x1xf32>
    %116 = vector.extract_strided_slice %88 {offsets = [4, 0], sizes = [1, 128], strides = [1, 1]} : vector<20x128xf32> to vector<1x128xf32>
    %117 = vector.broadcast %115 : vector<5x1xf32> to vector<5x128xf32>
    %118 = vector.broadcast %116 : vector<1x128xf32> to vector<5x128xf32>
    %119 = arith.mulf %117, %118 : vector<5x128xf32>
    %120 = arith.addf %114, %119 : vector<5x128xf32>
    %c0_35 = arith.constant 0 : index
    %c5_36 = arith.constant 5 : index
    %121 = vector.load %arg6[%c0_35, %c5_36] : memref<5x20xf32, #tpu.memory_space<vmem>>, vector<5x1xf32>
    %122 = vector.extract_strided_slice %88 {offsets = [5, 0], sizes = [1, 128], strides = [1, 1]} : vector<20x128xf32> to vector<1x128xf32>
    %123 = vector.broadcast %121 : vector<5x1xf32> to vector<5x128xf32>
    %124 = vector.broadcast %122 : vector<1x128xf32> to vector<5x128xf32>
    %125 = arith.mulf %123, %124 : vector<5x128xf32>
    %126 = arith.addf %120, %125 : vector<5x128xf32>
    %c0_37 = arith.constant 0 : index
    %c6_38 = arith.constant 6 : index
    %127 = vector.load %arg6[%c0_37, %c6_38] : memref<5x20xf32, #tpu.memory_space<vmem>>, vector<5x1xf32>
    %128 = vector.extract_strided_slice %88 {offsets = [6, 0], sizes = [1, 128], strides = [1, 1]} : vector<20x128xf32> to vector<1x128xf32>
    %129 = vector.broadcast %127 : vector<5x1xf32> to vector<5x128xf32>
    %130 = vector.broadcast %128 : vector<1x128xf32> to vector<5x128xf32>
    %131 = arith.mulf %129, %130 : vector<5x128xf32>
    %132 = arith.addf %126, %131 : vector<5x128xf32>
    %c0_39 = arith.constant 0 : index
    %c7_40 = arith.constant 7 : index
    %133 = vector.load %arg6[%c0_39, %c7_40] : memref<5x20xf32, #tpu.memory_space<vmem>>, vector<5x1xf32>
    %134 = vector.extract_strided_slice %88 {offsets = [7, 0], sizes = [1, 128], strides = [1, 1]} : vector<20x128xf32> to vector<1x128xf32>
    %135 = vector.broadcast %133 : vector<5x1xf32> to vector<5x128xf32>
    %136 = vector.broadcast %134 : vector<1x128xf32> to vector<5x128xf32>
    %137 = arith.mulf %135, %136 : vector<5x128xf32>
    %138 = arith.addf %132, %137 : vector<5x128xf32>
    %c0_41 = arith.constant 0 : index
    %c8_42 = arith.constant 8 : index
    %139 = vector.load %arg6[%c0_41, %c8_42] : memref<5x20xf32, #tpu.memory_space<vmem>>, vector<5x1xf32>
    %140 = vector.extract_strided_slice %88 {offsets = [8, 0], sizes = [1, 128], strides = [1, 1]} : vector<20x128xf32> to vector<1x128xf32>
    %141 = vector.broadcast %139 : vector<5x1xf32> to vector<5x128xf32>
    %142 = vector.broadcast %140 : vector<1x128xf32> to vector<5x128xf32>
    %143 = arith.mulf %141, %142 : vector<5x128xf32>
    %144 = arith.addf %138, %143 : vector<5x128xf32>
    %c0_43 = arith.constant 0 : index
    %c9_44 = arith.constant 9 : index
    %145 = vector.load %arg6[%c0_43, %c9_44] : memref<5x20xf32, #tpu.memory_space<vmem>>, vector<5x1xf32>
    %146 = vector.extract_strided_slice %88 {offsets = [9, 0], sizes = [1, 128], strides = [1, 1]} : vector<20x128xf32> to vector<1x128xf32>
    %147 = vector.broadcast %145 : vector<5x1xf32> to vector<5x128xf32>
    %148 = vector.broadcast %146 : vector<1x128xf32> to vector<5x128xf32>
    %149 = arith.mulf %147, %148 : vector<5x128xf32>
    %150 = arith.addf %144, %149 : vector<5x128xf32>
    %c0_45 = arith.constant 0 : index
    %c10 = arith.constant 10 : index
    %151 = vector.load %arg6[%c0_45, %c10] : memref<5x20xf32, #tpu.memory_space<vmem>>, vector<5x1xf32>
    %152 = vector.extract_strided_slice %88 {offsets = [10, 0], sizes = [1, 128], strides = [1, 1]} : vector<20x128xf32> to vector<1x128xf32>
    %153 = vector.broadcast %151 : vector<5x1xf32> to vector<5x128xf32>
    %154 = vector.broadcast %152 : vector<1x128xf32> to vector<5x128xf32>
    %155 = arith.mulf %153, %154 : vector<5x128xf32>
    %156 = arith.addf %150, %155 : vector<5x128xf32>
    %c0_46 = arith.constant 0 : index
    %c11 = arith.constant 11 : index
    %157 = vector.load %arg6[%c0_46, %c11] : memref<5x20xf32, #tpu.memory_space<vmem>>, vector<5x1xf32>
    %158 = vector.extract_strided_slice %88 {offsets = [11, 0], sizes = [1, 128], strides = [1, 1]} : vector<20x128xf32> to vector<1x128xf32>
    %159 = vector.broadcast %157 : vector<5x1xf32> to vector<5x128xf32>
    %160 = vector.broadcast %158 : vector<1x128xf32> to vector<5x128xf32>
    %161 = arith.mulf %159, %160 : vector<5x128xf32>
    %162 = arith.addf %156, %161 : vector<5x128xf32>
    %c0_47 = arith.constant 0 : index
    %c12 = arith.constant 12 : index
    %163 = vector.load %arg6[%c0_47, %c12] : memref<5x20xf32, #tpu.memory_space<vmem>>, vector<5x1xf32>
    %164 = vector.extract_strided_slice %88 {offsets = [12, 0], sizes = [1, 128], strides = [1, 1]} : vector<20x128xf32> to vector<1x128xf32>
    %165 = vector.broadcast %163 : vector<5x1xf32> to vector<5x128xf32>
    %166 = vector.broadcast %164 : vector<1x128xf32> to vector<5x128xf32>
    %167 = arith.mulf %165, %166 : vector<5x128xf32>
    %168 = arith.addf %162, %167 : vector<5x128xf32>
    %c0_48 = arith.constant 0 : index
    %c13 = arith.constant 13 : index
    %169 = vector.load %arg6[%c0_48, %c13] : memref<5x20xf32, #tpu.memory_space<vmem>>, vector<5x1xf32>
    %170 = vector.extract_strided_slice %88 {offsets = [13, 0], sizes = [1, 128], strides = [1, 1]} : vector<20x128xf32> to vector<1x128xf32>
    %171 = vector.broadcast %169 : vector<5x1xf32> to vector<5x128xf32>
    %172 = vector.broadcast %170 : vector<1x128xf32> to vector<5x128xf32>
    %173 = arith.mulf %171, %172 : vector<5x128xf32>
    %174 = arith.addf %168, %173 : vector<5x128xf32>
    %c0_49 = arith.constant 0 : index
    %c14 = arith.constant 14 : index
    %175 = vector.load %arg6[%c0_49, %c14] : memref<5x20xf32, #tpu.memory_space<vmem>>, vector<5x1xf32>
    %176 = vector.extract_strided_slice %88 {offsets = [14, 0], sizes = [1, 128], strides = [1, 1]} : vector<20x128xf32> to vector<1x128xf32>
    %177 = vector.broadcast %175 : vector<5x1xf32> to vector<5x128xf32>
    %178 = vector.broadcast %176 : vector<1x128xf32> to vector<5x128xf32>
    %179 = arith.mulf %177, %178 : vector<5x128xf32>
    %180 = arith.addf %174, %179 : vector<5x128xf32>
    %c0_50 = arith.constant 0 : index
    %c15 = arith.constant 15 : index
    %181 = vector.load %arg6[%c0_50, %c15] : memref<5x20xf32, #tpu.memory_space<vmem>>, vector<5x1xf32>
    %182 = vector.extract_strided_slice %88 {offsets = [15, 0], sizes = [1, 128], strides = [1, 1]} : vector<20x128xf32> to vector<1x128xf32>
    %183 = vector.broadcast %181 : vector<5x1xf32> to vector<5x128xf32>
    %184 = vector.broadcast %182 : vector<1x128xf32> to vector<5x128xf32>
    %185 = arith.mulf %183, %184 : vector<5x128xf32>
    %186 = arith.addf %180, %185 : vector<5x128xf32>
    %c0_51 = arith.constant 0 : index
    %c16 = arith.constant 16 : index
    %187 = vector.load %arg6[%c0_51, %c16] : memref<5x20xf32, #tpu.memory_space<vmem>>, vector<5x1xf32>
    %188 = vector.extract_strided_slice %88 {offsets = [16, 0], sizes = [1, 128], strides = [1, 1]} : vector<20x128xf32> to vector<1x128xf32>
    %189 = vector.broadcast %187 : vector<5x1xf32> to vector<5x128xf32>
    %190 = vector.broadcast %188 : vector<1x128xf32> to vector<5x128xf32>
    %191 = arith.mulf %189, %190 : vector<5x128xf32>
    %192 = arith.addf %186, %191 : vector<5x128xf32>
    %c0_52 = arith.constant 0 : index
    %c17 = arith.constant 17 : index
    %193 = vector.load %arg6[%c0_52, %c17] : memref<5x20xf32, #tpu.memory_space<vmem>>, vector<5x1xf32>
    %194 = vector.extract_strided_slice %88 {offsets = [17, 0], sizes = [1, 128], strides = [1, 1]} : vector<20x128xf32> to vector<1x128xf32>
    %195 = vector.broadcast %193 : vector<5x1xf32> to vector<5x128xf32>
    %196 = vector.broadcast %194 : vector<1x128xf32> to vector<5x128xf32>
    %197 = arith.mulf %195, %196 : vector<5x128xf32>
    %198 = arith.addf %192, %197 : vector<5x128xf32>
    %c0_53 = arith.constant 0 : index
    %c18 = arith.constant 18 : index
    %199 = vector.load %arg6[%c0_53, %c18] : memref<5x20xf32, #tpu.memory_space<vmem>>, vector<5x1xf32>
    %200 = vector.extract_strided_slice %88 {offsets = [18, 0], sizes = [1, 128], strides = [1, 1]} : vector<20x128xf32> to vector<1x128xf32>
    %201 = vector.broadcast %199 : vector<5x1xf32> to vector<5x128xf32>
    %202 = vector.broadcast %200 : vector<1x128xf32> to vector<5x128xf32>
    %203 = arith.mulf %201, %202 : vector<5x128xf32>
    %204 = arith.addf %198, %203 : vector<5x128xf32>
    %c0_54 = arith.constant 0 : index
    %c19 = arith.constant 19 : index
    %205 = vector.load %arg6[%c0_54, %c19] : memref<5x20xf32, #tpu.memory_space<vmem>>, vector<5x1xf32>
    %206 = vector.extract_strided_slice %88 {offsets = [19, 0], sizes = [1, 128], strides = [1, 1]} : vector<20x128xf32> to vector<1x128xf32>
    %207 = vector.broadcast %205 : vector<5x1xf32> to vector<5x128xf32>
    %208 = vector.broadcast %206 : vector<1x128xf32> to vector<5x128xf32>
    %209 = arith.mulf %207, %208 : vector<5x128xf32>
    %210 = arith.addf %204, %209 : vector<5x128xf32>
    %211 = vector.extract_strided_slice %210 {offsets = [0, 0], sizes = [1, 128], strides = [1, 1]} : vector<5x128xf32> to vector<1x128xf32>
    %212 = vector.extract_strided_slice %210 {offsets = [1, 0], sizes = [1, 128], strides = [1, 1]} : vector<5x128xf32> to vector<1x128xf32>
    %213 = arith.maximumf %211, %212 : vector<1x128xf32>
    %214 = vector.extract_strided_slice %210 {offsets = [2, 0], sizes = [1, 128], strides = [1, 1]} : vector<5x128xf32> to vector<1x128xf32>
    %215 = arith.maximumf %213, %214 : vector<1x128xf32>
    %216 = vector.extract_strided_slice %210 {offsets = [3, 0], sizes = [1, 128], strides = [1, 1]} : vector<5x128xf32> to vector<1x128xf32>
    %217 = arith.maximumf %215, %216 : vector<1x128xf32>
    %218 = vector.extract_strided_slice %210 {offsets = [4, 0], sizes = [1, 128], strides = [1, 1]} : vector<5x128xf32> to vector<1x128xf32>
    %219 = arith.maximumf %217, %218 : vector<1x128xf32>
    %220 = vector.broadcast %219 : vector<1x128xf32> to vector<5x128xf32>
    %221 = arith.subf %210, %220 : vector<5x128xf32>
    %222 = math.exp %221 : vector<5x128xf32>
    %223 = vector.extract_strided_slice %222 {offsets = [0, 0], sizes = [1, 128], strides = [1, 1]} : vector<5x128xf32> to vector<1x128xf32>
    %224 = vector.extract_strided_slice %222 {offsets = [1, 0], sizes = [1, 128], strides = [1, 1]} : vector<5x128xf32> to vector<1x128xf32>
    %225 = arith.addf %223, %224 : vector<1x128xf32>
    %226 = vector.extract_strided_slice %222 {offsets = [2, 0], sizes = [1, 128], strides = [1, 1]} : vector<5x128xf32> to vector<1x128xf32>
    %227 = arith.addf %225, %226 : vector<1x128xf32>
    %228 = vector.extract_strided_slice %222 {offsets = [3, 0], sizes = [1, 128], strides = [1, 1]} : vector<5x128xf32> to vector<1x128xf32>
    %229 = arith.addf %227, %228 : vector<1x128xf32>
    %230 = vector.extract_strided_slice %222 {offsets = [4, 0], sizes = [1, 128], strides = [1, 1]} : vector<5x128xf32> to vector<1x128xf32>
    %231 = arith.addf %229, %230 : vector<1x128xf32>
    %232 = vector.broadcast %231 : vector<1x128xf32> to vector<5x128xf32>
    %233 = arith.divf %222, %232 : vector<5x128xf32>
    %c0_55 = arith.constant 0 : index
    %c0_56 = arith.constant 0 : index
    %234 = vector.load %arg8[%c0_55, %c0_56] : memref<5x128xf32, #tpu.memory_space<vmem>>, vector<5x128xf32>
    tpu.vector_store %arg8[%c0_55, %c0_56], %233 {strides = array<i32>} : memref<5x128xf32, #tpu.memory_space<vmem>>, vector<5x128xf32>,
    return
  }
  func.func @transform_0(%arg0: i32) -> (i32, i32) {
    %c0_i32 = arith.constant 0 : i32
    %c0_i32_0 = arith.constant 0 : i32
    return %c0_i32, %arg0 : i32, i32
  }
  func.func @transform_1(%arg0: i32) -> (i32, i32) {
    %c0_i32 = arith.constant 0 : i32
    %c0_i32_0 = arith.constant 0 : i32
    %c0_i32_1 = arith.constant 0 : i32
    return %c0_i32, %c0_i32_0 : i32, i32
  }
  func.func @transform_2(%arg0: i32) -> (i32, i32) {
    %c0_i32 = arith.constant 0 : i32
    %c0_i32_0 = arith.constant 0 : i32
    %c0_i32_1 = arith.constant 0 : i32
    return %c0_i32, %c0_i32_0 : i32, i32
  }
  func.func @transform_3(%arg0: i32) -> (i32, i32) {
    %c0_i32 = arith.constant 0 : i32
    %c0_i32_0 = arith.constant 0 : i32
    %c0_i32_1 = arith.constant 0 : i32
    return %c0_i32, %c0_i32_0 : i32, i32
  }
  func.func @transform_4(%arg0: i32) -> (i32, i32) {
    %c0_i32 = arith.constant 0 : i32
    %c0_i32_0 = arith.constant 0 : i32
    %c0_i32_1 = arith.constant 0 : i32
    return %c0_i32, %c0_i32_0 : i32, i32
  }
  func.func @transform_5(%arg0: i32) -> (i32, i32) {
    %c0_i32 = arith.constant 0 : i32
    %c0_i32_0 = arith.constant 0 : i32
    %c0_i32_1 = arith.constant 0 : i32
    return %c0_i32, %c0_i32_0 : i32, i32
  }
  func.func @transform_6(%arg0: i32) -> (i32, i32) {
    %c0_i32 = arith.constant 0 : i32
    %c0_i32_0 = arith.constant 0 : i32
    %c0_i32_1 = arith.constant 0 : i32
    return %c0_i32, %c0_i32_0 : i32, i32
  }
  func.func @transform_7(%arg0: i32) -> (i32, i32) {
    %c0_i32 = arith.constant 0 : i32
    %c0_i32_0 = arith.constant 0 : i32
    return %c0_i32, %arg0 : i32, i32
  }
}

</mosaic_0001>

<llo_original>
// kernel: tpu_custom_call.1
$region0: #{tpu_custom_call.1}
  #allocation0 [shape = 'u32[]', space=smem, size = 0x4, offset = 0x4, fixed_abs, tag = 'smem constant byte address 0x4 - core index']
  #allocation1 [shape = 'u32[144,128]{1,0:T(1,128)}', space=vmem, size = 0x12000, scoped, tag = 'internal scratch']
  %s0 = inlined_call_operand.vmem [shape: f32[3,128], index: 0, kind: input, shape index: {}]
  %s1 = inlined_call_operand.vmem [shape: f32[10,3], index: 1, kind: input, shape index: {}]
  %s2 = inlined_call_operand.vmem [shape: f32[10,1], index: 2, kind: input, shape index: {}]
  %s3 = inlined_call_operand.vmem [shape: f32[20,10], index: 3, kind: input, shape index: {}]
  %s4 = inlined_call_operand.vmem [shape: f32[20,1], index: 4, kind: input, shape index: {}]
  %s5 = inlined_call_operand.vmem [shape: f32[5,20], index: 5, kind: input, shape index: {}]
  %s6 = inlined_call_operand.vmem [shape: f32[5,1], index: 6, kind: input, shape index: {}]
  %s7 = inlined_call_operand.hbm [shape: f32[5,128], index: 7, kind: output, shape index: {}]
  %s8 = sld [smem:[#allocation0]]
  $region38: #{tpu_custom_call.1} parent=0
    _
  %s10 = ssub.s32 1, %s8
  %s11 = scalar_select 0, %s10, %s8
  $region1: #{tpu_custom_call.1} parent=0
    #allocation2 [shape = 'u8[4096]{0}', space=vmem, size = 0x1000, scoped, tag = 'output window, operand 0, single buffered']
    #allocation3 [shape = 's32[1]{0}', space=sflag, size = 0x4, scoped, tag = 'scoped memory for tpu_custom_call.1']
    %12 = vsyncpa [#allocation3], 0
    // Predicated region
    $region2: #{tpu_custom_call.1} parent=1 // pred_check
      _
    $region3: #{tpu_custom_call.1} parent=1 // pred_check_branch
      %14 = sbr.rel (0) target = $region5
    $region4: #{tpu_custom_call.1} parent=1 // pred_region
      _
    $region5: #{tpu_custom_call.1} parent=1 // pred_fallthru
      _
    // Predicated region
    $region6: #{tpu_custom_call.1} parent=1 // pred_check
      _
    $region7: #{tpu_custom_call.1} parent=1 // pred_check_branch
      %16 = sbr.rel (0) target = $region9
    $region8: #{tpu_custom_call.1} parent=1 // pred_region
      _
    $region9: #{tpu_custom_call.1} parent=1 // pred_fallthru
      _
    // Predicated region
    $region10: #{tpu_custom_call.1} parent=1 // pred_check
      _
    $region11: #{tpu_custom_call.1} parent=1 // pred_check_branch
      %18 = sbr.rel (0) target = $region13
    $region12: #{tpu_custom_call.1} parent=1 // pred_region
      _
    $region13: #{tpu_custom_call.1} parent=1 // pred_fallthru
      _
    // Predicated region
    $region14: #{tpu_custom_call.1} parent=1 // pred_check
      _
    $region15: #{tpu_custom_call.1} parent=1 // pred_check_branch
      %20 = sbr.rel (0) target = $region17
    $region16: #{tpu_custom_call.1} parent=1 // pred_region
      _
    $region17: #{tpu_custom_call.1} parent=1 // pred_fallthru
      _
    // Predicated region
    $region18: #{tpu_custom_call.1} parent=1 // pred_check
      _
    $region19: #{tpu_custom_call.1} parent=1 // pred_check_branch
      %22 = sbr.rel (0) target = $region21
    $region20: #{tpu_custom_call.1} parent=1 // pred_region
      _
    $region21: #{tpu_custom_call.1} parent=1 // pred_fallthru
      _
    // Predicated region
    $region22: #{tpu_custom_call.1} parent=1 // pred_check
      _
    $region23: #{tpu_custom_call.1} parent=1 // pred_check_branch
      %24 = sbr.rel (0) target = $region25
    $region24: #{tpu_custom_call.1} parent=1 // pred_region
      _
    $region25: #{tpu_custom_call.1} parent=1 // pred_fallthru
      _
    // Predicated region
    $region26: #{tpu_custom_call.1} parent=1 // pred_check
      _
    $region27: #{tpu_custom_call.1} parent=1 // pred_check_branch
      %26 = sbr.rel (0) target = $region29
    $region28: #{tpu_custom_call.1} parent=1 // pred_region
      _
    $region29: #{tpu_custom_call.1} parent=1 // pred_fallthru
      _
    %v27 = vld [vmem:[%s0] sm:$0x7]
    %v28 = vld [vmem:[%s2] sm:$0xff]
    %v29 = vld [vmem:[%s2 + $0x8] sm:$0x3]
    %v30 = vld [vmem:[%s1] sm:$0xff]
    %v31 = vld [vmem:[%s1 + $0x8] sm:$0x3]
    %33 = vset.pattern.permute.xlu0 0
    %34 = vperm.xlu0 %33, %v30
    %v35 = vpop.permute.xlu0 %34
    %38 = vset.pattern.permute.xlu0 0
    %39 = vperm.xlu0 %38, %v31
    %v40 = vpop.permute.xlu0 %39
    %v42 = vlaneseq
    %v43 = vshrl.u32 %v42, 7
    %v44 = vsub.s32 0, %v43
    %v45 = vrot.slane %v27, %v44
    %v46 = vmul.f32 %v35, %v45
    %v47 = vmul.f32 %v40, %v45
    %49 = vset.pattern.permute.xlu0 0
    %50 = vperm.xlu0 %49, %v28
    %v51 = vpop.permute.xlu0 %50
    %54 = vset.pattern.permute.xlu0 0
    %55 = vperm.xlu0 %54, %v29
    %v56 = vpop.permute.xlu0 %55
    %v58 = vadd.f32 %v51, %v46
    %v59 = vadd.f32 %v56, %v47
    %60 = vset.pattern.permute.xlu0 1
    %61 = vperm.xlu0 %60, %v30
    %v62 = vpop.permute.xlu0 %61
    %64 = vset.pattern.permute.xlu0 1
    %65 = vperm.xlu0 %64, %v31
    %v66 = vpop.permute.xlu0 %65
    %v68 = vlaneseq
    %v69 = vshrl.u32 %v68, 7
    %v70 = vsub.s32 1, %v69
    %v71 = vrot.slane %v27, %v70
    %v72 = vmul.f32 %v62, %v71
    %v73 = vmul.f32 %v66, %v71
    %v74 = vadd.f32 %v58, %v72
    %v75 = vadd.f32 %v59, %v73
    %76 = vset.pattern.permute.xlu0 2
    %77 = vperm.xlu0 %76, %v30
    %v78 = vpop.permute.xlu0 %77
    %80 = vset.pattern.permute.xlu0 2
    %81 = vperm.xlu0 %80, %v31
    %v82 = vpop.permute.xlu0 %81
    %v84 = vlaneseq
    %v85 = vshrl.u32 %v84, 7
    %v86 = vsub.s32 2, %v85
    %v87 = vrot.slane %v27, %v86
    %v88 = vmul.f32 %v78, %v87
    %v89 = vmul.f32 %v82, %v87
    %v90 = vadd.f32 %v74, %v88
    %v91 = vadd.f32 %v75, %v89
    %v92 = vmul.f32 %v90, 0.01
    %v93 = vmul.f32 %v91, 0.01
    %v94 = vmax.f32 %v90, %v92
    %v95 = vmax.f32 %v91, %v93
    %v96 = vld [vmem:[%s4] sm:$0xff]
    %v97 = vld [vmem:[%s4 + $0x8] sm:$0xff]
    %v98 = vld [vmem:[%s4 + $0x10] sm:$0xf]
    %v99 = vld [vmem:[%s3] sm:$0xff]
    %v100 = vld [vmem:[%s3 + $0x8] sm:$0xff]
    %v101 = vld [vmem:[%s3 + $0x10] sm:$0xf]
    %103 = vset.pattern.permute.xlu0 0
    %104 = vperm.xlu0 %103, %v99
    %v105 = vpop.permute.xlu0 %104
    %108 = vset.pattern.permute.xlu0 0
    %109 = vperm.xlu0 %108, %v100
    %v110 = vpop.permute.xlu0 %109
    %113 = vset.pattern.permute.xlu0 0
    %114 = vperm.xlu0 %113, %v101
    %v115 = vpop.permute.xlu0 %114
    %v117 = vlaneseq
    %v118 = vshrl.u32 %v117, 7
    %v119 = vsub.s32 0, %v118
    %v120 = vrot.slane %v94, %v119
    %v121 = vmul.f32 %v105, %v120
    %v122 = vmul.f32 %v110, %v120
    %v123 = vmul.f32 %v115, %v120
    %125 = vset.pattern.permute.xlu0 0
    %126 = vperm.xlu0 %125, %v96
    %v127 = vpop.permute.xlu0 %126
    %130 = vset.pattern.permute.xlu0 0
    %131 = vperm.xlu0 %130, %v97
    %v132 = vpop.permute.xlu0 %131
    %135 = vset.pattern.permute.xlu0 0
    %136 = vperm.xlu0 %135, %v98
    %v137 = vpop.permute.xlu0 %136
    %v139 = vadd.f32 %v127, %v121
    %v140 = vadd.f32 %v132, %v122
    %v141 = vadd.f32 %v137, %v123
    %142 = vset.pattern.permute.xlu0 1
    %143 = vperm.xlu0 %142, %v99
    %v144 = vpop.permute.xlu0 %143
    %146 = vset.pattern.permute.xlu0 1
    %147 = vperm.xlu0 %146, %v100
    %v148 = vpop.permute.xlu0 %147
    %150 = vset.pattern.permute.xlu0 1
    %151 = vperm.xlu0 %150, %v101
    %v152 = vpop.permute.xlu0 %151
    %v154 = vlaneseq
    %v155 = vshrl.u32 %v154, 7
    %v156 = vsub.s32 1, %v155
    %v157 = vrot.slane %v94, %v156
    %v158 = vmul.f32 %v144, %v157
    %v159 = vmul.f32 %v148, %v157
    %v160 = vmul.f32 %v152, %v157
    %v161 = vadd.f32 %v139, %v158
    %v162 = vadd.f32 %v140, %v159
    %v163 = vadd.f32 %v141, %v160
    %164 = vset.pattern.permute.xlu0 2
    %165 = vperm.xlu0 %164, %v99
    %v166 = vpop.permute.xlu0 %165
    %168 = vset.pattern.permute.xlu0 2
    %169 = vperm.xlu0 %168, %v100
    %v170 = vpop.permute.xlu0 %169
    %172 = vset.pattern.permute.xlu0 2
    %173 = vperm.xlu0 %172, %v101
    %v174 = vpop.permute.xlu0 %173
    %v176 = vlaneseq
    %v177 = vshrl.u32 %v176, 7
    %v178 = vsub.s32 2, %v177
    %v179 = vrot.slane %v94, %v178
    %v180 = vmul.f32 %v166, %v179
    %v181 = vmul.f32 %v170, %v179
    %v182 = vmul.f32 %v174, %v179
    %v183 = vadd.f32 %v161, %v180
    %v184 = vadd.f32 %v162, %v181
    %v185 = vadd.f32 %v163, %v182
    %186 = vset.pattern.permute.xlu0 3
    %187 = vperm.xlu0 %186, %v99
    %v188 = vpop.permute.xlu0 %187
    %190 = vset.pattern.permute.xlu0 3
    %191 = vperm.xlu0 %190, %v100
    %v192 = vpop.permute.xlu0 %191
    %194 = vset.pattern.permute.xlu0 3
    %195 = vperm.xlu0 %194, %v101
    %v196 = vpop.permute.xlu0 %195
    %v198 = vlaneseq
    %v199 = vshrl.u32 %v198, 7
    %v200 = vsub.s32 3, %v199
    %v201 = vrot.slane %v94, %v200
    %v202 = vmul.f32 %v188, %v201
    %v203 = vmul.f32 %v192, %v201
    %v204 = vmul.f32 %v196, %v201
    %v205 = vadd.f32 %v183, %v202
    %v206 = vadd.f32 %v184, %v203
    %v207 = vadd.f32 %v185, %v204
    %208 = vset.pattern.permute.xlu0 4
    %209 = vperm.xlu0 %208, %v99
    %v210 = vpop.permute.xlu0 %209
    %212 = vset.pattern.permute.xlu0 4
    %213 = vperm.xlu0 %212, %v100
    %v214 = vpop.permute.xlu0 %213
    %216 = vset.pattern.permute.xlu0 4
    %217 = vperm.xlu0 %216, %v101
    %v218 = vpop.permute.xlu0 %217
    %v220 = vlaneseq
    %v221 = vshrl.u32 %v220, 7
    %v222 = vsub.s32 4, %v221
    %v223 = vrot.slane %v94, %v222
    %v224 = vmul.f32 %v210, %v223
    %v225 = vmul.f32 %v214, %v223
    %v226 = vmul.f32 %v218, %v223
    %v227 = vadd.f32 %v205, %v224
    %v228 = vadd.f32 %v206, %v225
    %v229 = vadd.f32 %v207, %v226
    %230 = vset.pattern.permute.xlu0 5
    %231 = vperm.xlu0 %230, %v99
    %v232 = vpop.permute.xlu0 %231
    %234 = vset.pattern.permute.xlu0 5
    %235 = vperm.xlu0 %234, %v100
    %v236 = vpop.permute.xlu0 %235
    %238 = vset.pattern.permute.xlu0 5
    %239 = vperm.xlu0 %238, %v101
    %v240 = vpop.permute.xlu0 %239
    %v242 = vlaneseq
    %v243 = vshrl.u32 %v242, 7
    %v244 = vsub.s32 5, %v243
    %v245 = vrot.slane %v94, %v244
    %v246 = vmul.f32 %v232, %v245
    %v247 = vmul.f32 %v236, %v245
    %v248 = vmul.f32 %v240, %v245
    %v249 = vadd.f32 %v227, %v246
    %v250 = vadd.f32 %v228, %v247
    %v251 = vadd.f32 %v229, %v248
    %252 = vset.pattern.permute.xlu0 6
    %253 = vperm.xlu0 %252, %v99
    %v254 = vpop.permute.xlu0 %253
    %256 = vset.pattern.permute.xlu0 6
    %257 = vperm.xlu0 %256, %v100
    %v258 = vpop.permute.xlu0 %257
    %260 = vset.pattern.permute.xlu0 6
    %261 = vperm.xlu0 %260, %v101
    %v262 = vpop.permute.xlu0 %261
    %v264 = vlaneseq
    %v265 = vshrl.u32 %v264, 7
    %v266 = vsub.s32 6, %v265
    %v267 = vrot.slane %v94, %v266
    %v268 = vmul.f32 %v254, %v267
    %v269 = vmul.f32 %v258, %v267
    %v270 = vmul.f32 %v262, %v267
    %v271 = vadd.f32 %v249, %v268
    %v272 = vadd.f32 %v250, %v269
    %v273 = vadd.f32 %v251, %v270
    %274 = vset.pattern.permute.xlu0 7
    %275 = vperm.xlu0 %274, %v99
    %v276 = vpop.permute.xlu0 %275
    %278 = vset.pattern.permute.xlu0 7
    %279 = vperm.xlu0 %278, %v100
    %v280 = vpop.permute.xlu0 %279
    %282 = vset.pattern.permute.xlu0 7
    %283 = vperm.xlu0 %282, %v101
    %v284 = vpop.permute.xlu0 %283
    %v286 = vlaneseq
    %v287 = vshrl.u32 %v286, 7
    %v288 = vsub.s32 7, %v287
    %v289 = vrot.slane %v94, %v288
    %v290 = vmul.f32 %v276, %v289
    %v291 = vmul.f32 %v280, %v289
    %v292 = vmul.f32 %v284, %v289
    %v293 = vadd.f32 %v271, %v290
    %v294 = vadd.f32 %v272, %v291
    %v295 = vadd.f32 %v273, %v292
    %296 = vset.pattern.permute.xlu0 8
    %297 = vperm.xlu0 %296, %v99
    %v298 = vpop.permute.xlu0 %297
    %300 = vset.pattern.permute.xlu0 8
    %301 = vperm.xlu0 %300, %v100
    %v302 = vpop.permute.xlu0 %301
    %304 = vset.pattern.permute.xlu0 8
    %305 = vperm.xlu0 %304, %v101
    %v306 = vpop.permute.xlu0 %305
    %v308 = vlaneseq
    %v309 = vshrl.u32 %v308, 7
    %v310 = vsub.s32 0, %v309
    %v311 = vrot.slane %v95, %v310
    %v312 = vmul.f32 %v298, %v311
    %v313 = vmul.f32 %v302, %v311
    %v314 = vmul.f32 %v306, %v311
    %v315 = vadd.f32 %v293, %v312
    %v316 = vadd.f32 %v294, %v313
    %v317 = vadd.f32 %v295, %v314
    %318 = vset.pattern.permute.xlu0 9
    %319 = vperm.xlu0 %318, %v99
    %v320 = vpop.permute.xlu0 %319
    %322 = vset.pattern.permute.xlu0 9
    %323 = vperm.xlu0 %322, %v100
    %v324 = vpop.permute.xlu0 %323
    %326 = vset.pattern.permute.xlu0 9
    %327 = vperm.xlu0 %326, %v101
    %v328 = vpop.permute.xlu0 %327
    %v330 = vlaneseq
    %v331 = vshrl.u32 %v330, 7
    %v332 = vsub.s32 1, %v331
    %v333 = vrot.slane %v95, %v332
    %v334 = vmul.f32 %v320, %v333
    %v335 = vmul.f32 %v324, %v333
    %v336 = vmul.f32 %v328, %v333
    %v337 = vadd.f32 %v315, %v334
    %v338 = vadd.f32 %v316, %v335
    %v339 = vadd.f32 %v317, %v336
    %v340 = vmul.f32 %v337, 0.01
    %v341 = vmul.f32 %v338, 0.01
    %v342 = vmul.f32 %v339, 0.01
    %v343 = vmax.f32 %v337, %v340
    %v344 = vmax.f32 %v338, %v341
    %v345 = vmax.f32 %v339, %v342
    %v346 = vld [vmem:[%s6] sm:$0x1f]
    %v347 = vld [vmem:[%s5] sm:$0x1f]
    %349 = vset.pattern.permute.xlu0 0
    %350 = vperm.xlu0 %349, %v347
    %v351 = vpop.permute.xlu0 %350
    %v353 = vlaneseq
    %v354 = vshrl.u32 %v353, 7
    %v355 = vsub.s32 0, %v354
    %v356 = vrot.slane %v343, %v355
    %v357 = vmul.f32 %v351, %v356
    %359 = vset.pattern.permute.xlu0 0
    %360 = vperm.xlu0 %359, %v346
    %v361 = vpop.permute.xlu0 %360
    %v363 = vadd.f32 %v361, %v357
    %364 = vset.pattern.permute.xlu0 1
    %365 = vperm.xlu0 %364, %v347
    %v366 = vpop.permute.xlu0 %365
    %v368 = vlaneseq
    %v369 = vshrl.u32 %v368, 7
    %v370 = vsub.s32 1, %v369
    %v371 = vrot.slane %v343, %v370
    %v372 = vmul.f32 %v366, %v371
    %v373 = vadd.f32 %v363, %v372
    %374 = vset.pattern.permute.xlu0 2
    %375 = vperm.xlu0 %374, %v347
    %v376 = vpop.permute.xlu0 %375
    %v378 = vlaneseq
    %v379 = vshrl.u32 %v378, 7
    %v380 = vsub.s32 2, %v379
    %v381 = vrot.slane %v343, %v380
    %v382 = vmul.f32 %v376, %v381
    %v383 = vadd.f32 %v373, %v382
    %384 = vset.pattern.permute.xlu0 3
    %385 = vperm.xlu0 %384, %v347
    %v386 = vpop.permute.xlu0 %385
    %v388 = vlaneseq
    %v389 = vshrl.u32 %v388, 7
    %v390 = vsub.s32 3, %v389
    %v391 = vrot.slane %v343, %v390
    %v392 = vmul.f32 %v386, %v391
    %v393 = vadd.f32 %v383, %v392
    %394 = vset.pattern.permute.xlu0 4
    %395 = vperm.xlu0 %394, %v347
    %v396 = vpop.permute.xlu0 %395
    %v398 = vlaneseq
    %v399 = vshrl.u32 %v398, 7
    %v400 = vsub.s32 4, %v399
    %v401 = vrot.slane %v343, %v400
    %v402 = vmul.f32 %v396, %v401
    %v403 = vadd.f32 %v393, %v402
    %404 = vset.pattern.permute.xlu0 5
    %405 = vperm.xlu0 %404, %v347
    %v406 = vpop.permute.xlu0 %405
    %v408 = vlaneseq
    %v409 = vshrl.u32 %v408, 7
    %v410 = vsub.s32 5, %v409
    %v411 = vrot.slane %v343, %v410
    %v412 = vmul.f32 %v406, %v411
    %v413 = vadd.f32 %v403, %v412
    %414 = vset.pattern.permute.xlu0 6
    %415 = vperm.xlu0 %414, %v347
    %v416 = vpop.permute.xlu0 %415
    %v418 = vlaneseq
    %v419 = vshrl.u32 %v418, 7
    %v420 = vsub.s32 6, %v419
    %v421 = vrot.slane %v343, %v420
    %v422 = vmul.f32 %v416, %v421
    %v423 = vadd.f32 %v413, %v422
    %424 = vset.pattern.permute.xlu0 7
    %425 = vperm.xlu0 %424, %v347
    %v426 = vpop.permute.xlu0 %425
    %v428 = vlaneseq
    %v429 = vshrl.u32 %v428, 7
    %v430 = vsub.s32 7, %v429
    %v431 = vrot.slane %v343, %v430
    %v432 = vmul.f32 %v426, %v431
    %v433 = vadd.f32 %v423, %v432
    %434 = vset.pattern.permute.xlu0 8
    %435 = vperm.xlu0 %434, %v347
    %v436 = vpop.permute.xlu0 %435
    %v438 = vlaneseq
    %v439 = vshrl.u32 %v438, 7
    %v440 = vsub.s32 0, %v439
    %v441 = vrot.slane %v344, %v440
    %v442 = vmul.f32 %v436, %v441
    %v443 = vadd.f32 %v433, %v442
    %444 = vset.pattern.permute.xlu0 9
    %445 = vperm.xlu0 %444, %v347
    %v446 = vpop.permute.xlu0 %445
    %v448 = vlaneseq
    %v449 = vshrl.u32 %v448, 7
    %v450 = vsub.s32 1, %v449
    %v451 = vrot.slane %v344, %v450
    %v452 = vmul.f32 %v446, %v451
    %v453 = vadd.f32 %v443, %v452
    %454 = vset.pattern.permute.xlu0 10
    %455 = vperm.xlu0 %454, %v347
    %v456 = vpop.permute.xlu0 %455
    %v458 = vlaneseq
    %v459 = vshrl.u32 %v458, 7
    %v460 = vsub.s32 2, %v459
    %v461 = vrot.slane %v344, %v460
    %v462 = vmul.f32 %v456, %v461
    %v463 = vadd.f32 %v453, %v462
    %464 = vset.pattern.permute.xlu0 11
    %465 = vperm.xlu0 %464, %v347
    %v466 = vpop.permute.xlu0 %465
    %v468 = vlaneseq
    %v469 = vshrl.u32 %v468, 7
    %v470 = vsub.s32 3, %v469
    %v471 = vrot.slane %v344, %v470
    %v472 = vmul.f32 %v466, %v471
    %v473 = vadd.f32 %v463, %v472
    %474 = vset.pattern.permute.xlu0 12
    %475 = vperm.xlu0 %474, %v347
    %v476 = vpop.permute.xlu0 %475
    %v478 = vlaneseq
    %v479 = vshrl.u32 %v478, 7
    %v480 = vsub.s32 4, %v479
    %v481 = vrot.slane %v344, %v480
    %v482 = vmul.f32 %v476, %v481
    %v483 = vadd.f32 %v473, %v482
    %484 = vset.pattern.permute.xlu0 13
    %485 = vperm.xlu0 %484, %v347
    %v486 = vpop.permute.xlu0 %485
    %v488 = vlaneseq
    %v489 = vshrl.u32 %v488, 7
    %v490 = vsub.s32 5, %v489
    %v491 = vrot.slane %v344, %v490
    %v492 = vmul.f32 %v486, %v491
    %v493 = vadd.f32 %v483, %v492
    %494 = vset.pattern.permute.xlu0 14
    %495 = vperm.xlu0 %494, %v347
    %v496 = vpop.permute.xlu0 %495
    %v498 = vlaneseq
    %v499 = vshrl.u32 %v498, 7
    %v500 = vsub.s32 6, %v499
    %v501 = vrot.slane %v344, %v500
    %v502 = vmul.f32 %v496, %v501
    %v503 = vadd.f32 %v493, %v502
    %504 = vset.pattern.permute.xlu0 15
    %505 = vperm.xlu0 %504, %v347
    %v506 = vpop.permute.xlu0 %505
    %v508 = vlaneseq
    %v509 = vshrl.u32 %v508, 7
    %v510 = vsub.s32 7, %v509
    %v511 = vrot.slane %v344, %v510
    %v512 = vmul.f32 %v506, %v511
    %v513 = vadd.f32 %v503, %v512
    %514 = vset.pattern.permute.xlu0 16
    %515 = vperm.xlu0 %514, %v347
    %v516 = vpop.permute.xlu0 %515
    %v518 = vlaneseq
    %v519 = vshrl.u32 %v518, 7
    %v520 = vsub.s32 0, %v519
    %v521 = vrot.slane %v345, %v520
    %v522 = vmul.f32 %v516, %v521
    %v523 = vadd.f32 %v513, %v522
    %524 = vset.pattern.permute.xlu0 17
    %525 = vperm.xlu0 %524, %v347
    %v526 = vpop.permute.xlu0 %525
    %v528 = vlaneseq
    %v529 = vshrl.u32 %v528, 7
    %v530 = vsub.s32 1, %v529
    %v531 = vrot.slane %v345, %v530
    %v532 = vmul.f32 %v526, %v531
    %v533 = vadd.f32 %v523, %v532
    %534 = vset.pattern.permute.xlu0 18
    %535 = vperm.xlu0 %534, %v347
    %v536 = vpop.permute.xlu0 %535
    %v538 = vlaneseq
    %v539 = vshrl.u32 %v538, 7
    %v540 = vsub.s32 2, %v539
    %v541 = vrot.slane %v345, %v540
    %v542 = vmul.f32 %v536, %v541
    %v543 = vadd.f32 %v533, %v542
    %544 = vset.pattern.permute.xlu0 19
    %545 = vperm.xlu0 %544, %v347
    %v546 = vpop.permute.xlu0 %545
    %v548 = vlaneseq
    %v549 = vshrl.u32 %v548, 7
    %v550 = vsub.s32 3, %v549
    %v551 = vrot.slane %v345, %v550
    %v552 = vmul.f32 %v546, %v551
    %v553 = vadd.f32 %v543, %v552
    %v555 = vrot.slane %v553, 1
    %v557 = vmax.f32 %v553, %v555
    %v558 = vrot.slane %v553, 2
    %v560 = vmax.f32 %v557, %v558
    %v561 = vrot.slane %v553, 3
    %v563 = vmax.f32 %v560, %v561
    %v564 = vrot.slane %v553, 4
    %v566 = vmax.f32 %v563, %v564
    %v567 = vlaneseq
    %v568 = vshrl.u32 %v567, 7
    %v569 = vsub.s32 0, %v568
    %v570 = vrot.slane %v566, %v569
    %v571 = vsub.f32 %v553, %v570
    %v572 = vmul.f32 %v571, 1.442695
    %v573 = vpow.pop %v572
    %v575 = vrot.slane %v573, 1
    %v577 = vadd.f32 %v573, %v575
    %v578 = vrot.slane %v573, 2
    %v580 = vadd.f32 %v577, %v578
    %v581 = vrot.slane %v573, 3
    %v583 = vadd.f32 %v580, %v581
    %v584 = vrot.slane %v573, 4
    %v586 = vadd.f32 %v583, %v584
    %v587 = vlaneseq
    %v588 = vshrl.u32 %v587, 7
    %v589 = vsub.s32 0, %v588
    %v590 = vrot.slane %v586, %v589
    %v591 = vrcp.pop %v590
    %v592 = vmul.f32 %v573, %v591
    %593 = vst [vmem:[#allocation2] sm:$0x1f] %v592
    // Predicated region
    $region30: #{tpu_custom_call.1} parent=1 // pred_check
      _
    $region31: #{tpu_custom_call.1} parent=1 // pred_check_branch
      %595 = sbr.rel (0) target = $region33
    $region32: #{tpu_custom_call.1} parent=1 // pred_region
      %s597 = ssub.s32 128, 128
      %598 = vsyncadd [#allocation3], %s597
      %s600 = sshll.u32 [#allocation2], 4
      %s601 = int_to_ptr.vmem [resolvable:$true] %s600
      %603 = dma.vmem_to_hbm [thread:$0]  %s601, 128, %s7, [#allocation3]
    $region33: #{tpu_custom_call.1} parent=1 // pred_fallthru
      _
    // Predicated region
    $region34: #{tpu_custom_call.1} parent=1 // pred_check
      _
    $region35: #{tpu_custom_call.1} parent=1 // pred_check_branch
      %605 = sbr.rel (0) target = $region37
    $region36: #{tpu_custom_call.1} parent=1 // pred_region
      %606 = dma.done [#allocation3], 128
    $region37: #{tpu_custom_call.1} parent=1 // pred_fallthru
      _
    %607 = vsyncpa [#allocation3], 1

</llo_original>
